<compile_context>
chip_gen: v6e
topology: v6e:2x2x1
jax: 0.10.0
libtpu: 0.0.40
codegen_flags: <defaults>
</compile_context>

<pallas_src>
import jax
import jax.numpy as jnp
from jax.experimental import pallas as pl
from jax.experimental.pallas import tpu as pltpu


def _cdiv(a, b):
    return (a + b - 1) // b


def _round_up(a, b):
    return _cdiv(a, b) * b


def _vmem_capacity_bytes():
    try:
        return int(pltpu.get_tpu_info().vmem_capacity_bytes)
    except Exception:
        return 64 << 20  # conservative default (v7x per-TC VMEM)


def prepare_generator_params(weight, bias, param_dtype=jnp.bfloat16):
    """One-time parameter prep (hoisted out of the per-call hot path).

    weight: (vocab, d_model)  -- PyTorch nn.Linear layout
    bias:   (vocab,)
    Returns (w_t, bias2d): w_t = weight.T stored as (d_model, vocab) in
    `param_dtype` (bf16 halves weight HBM streaming and feeds the MXU
    directly); bias stays f32 as a (1, vocab) row for the f32 softmax path.
    """
    # TODO(synk): on v5e/v6e an int8-weight + per-column-scale path would halve
    # weight streaming again (do NOT carry it to v7x: fp8 MXU, no int support).
    w_t = jnp.asarray(weight).T.astype(param_dtype)  # (d_model, vocab)
    b2d = jnp.asarray(bias, dtype=jnp.float32).reshape(1, -1)
    return w_t, b2d


def generator_forward(x, w_t, bias, *, tm=256, tn=512, out_dtype=None):
    """log_softmax(x @ w_t + bias, axis=-1).

    x:    (..., d_model)
    w_t:  (d_model, vocab)  -- pre-transposed (see prepare_generator_params)
    bias: (vocab,) or (1, vocab), f32
    Returns (..., vocab) in `out_dtype` (default: x.dtype; pass jnp.bfloat16
    to halve output HBM writeback).
    """
    assert tn % 128 == 0, "vocab tile must be a multiple of 128 (lane width)"
    *lead, d_model = x.shape
    d_model_w, vocab = w_t.shape
    assert d_model == d_model_w
    out_dtype = x.dtype if out_dtype is None else jnp.dtype(out_dtype)
    out_itemsize = jnp.dtype(out_dtype).itemsize

    # Pre-cast x to the weight compute dtype (bf16): halves x DMA/VMEM and
    # removes the per-vocab-step in-kernel cast.  Numerics are unchanged
    # because the MXU matmul is bf16 either way.
    compute_dtype = w_t.dtype
    x2d = x.reshape(-1, d_model).astype(compute_dtype)
    n_rows = x2d.shape[0]
    b2d = jnp.asarray(bias, dtype=jnp.float32).reshape(1, vocab)

    # ---- vocab (lane) tiling: weight is streamed in (d_model, tn) tiles.
    tn_eff = min(tn, _round_up(vocab, 128))
    vocab_p = _round_up(vocab, tn_eff)
    n_vt = vocab_p // tn_eff

    # ---- row tiling: biggest tile whose resident working set (double-
    # buffered inputs + resident output block + LSE state) fits the physical
    # VMEM budget of this TPU generation.
    vmem_cap = _vmem_capacity_bytes()
    budget = max(vmem_cap - (8 << 20), 16 << 20)

    def resident_bytes(tm_):
        return (2 * tm_ * d_model * jnp.dtype(compute_dtype).itemsize   # x tile
                + 2 * d_model * tn_eff * jnp.dtype(w_t.dtype).itemsize  # w tile
                + 2 * tn_eff * 4                                        # bias
                + 2 * tm_ * vocab_p * out_itemsize                      # output
                + 2 * tm_ * 128 * 4)                                    # m, l

    tm_eff = _round_up(min(tm, _round_up(n_rows, 8)), 8)
    while tm_eff > 8 and resident_bytes(tm_eff) > budget:
        tm_eff = max(8, _round_up(tm_eff // 2, 8))
    # TODO(synk): if even tm=8 exceeds the budget (multi-million vocab), switch
    # to a two-pass variant (streaming-LSE kernel + normalize kernel).
    n_rows_p = _round_up(n_rows, tm_eff)
    n_rt = n_rows_p // tm_eff

    # ---- pad inputs (rows with zeros; padded vocab columns get a very
    # negative bias so they contribute nothing to the log-sum-exp).
    if n_rows_p != n_rows:
        x2d = jnp.pad(x2d, ((0, n_rows_p - n_rows), (0, 0)))
    w_p, b_p = w_t, b2d
    if vocab_p != vocab:
        w_p = jnp.pad(w_t, ((0, 0), (0, vocab_p - vocab)))
        b_p = jnp.pad(b2d, ((0, 0), (0, vocab_p - vocab)),
                      constant_values=-1e30)

    # ------------------------------------------------------------------ kernels
    def kernel_single(x_ref, w_ref, b_ref, o_ref):
        # Whole vocab in one tile: direct log-softmax, no online-LSE state.
        logits = jnp.dot(x_ref[...], w_ref[...],
                         preferred_element_type=jnp.float32) + b_ref[...]
        m = jnp.max(logits, axis=-1, keepdims=True)
        lse = m + jnp.log(jnp.sum(jnp.exp(logits - m), axis=-1, keepdims=True))
        o_ref[...] = (logits - lse).astype(o_ref.dtype)

    def kernel_tiled(x_ref, w_ref, b_ref, o_ref, m_ref, l_ref):
        j = pl.program_id(1)

        @pl.when(j == 0)
        def _init():
            m_ref[...] = jnp.full(m_ref.shape, -jnp.inf, dtype=jnp.float32)
            l_ref[...] = jnp.zeros(l_ref.shape, dtype=jnp.float32)

        # bf16 MXU matmul with f32 accumulation; bias add in f32.
        logits = jnp.dot(x_ref[...], w_ref[...],
                         preferred_element_type=jnp.float32) + b_ref[...]

        # Online log-sum-exp over the vocab (lane) axis.
        m_prev = m_ref[...]
        m_new = jnp.maximum(m_prev, jnp.max(logits, axis=-1, keepdims=True))
        l_ref[...] = (jnp.exp(m_prev - m_new) * l_ref[...]
                      + jnp.sum(jnp.exp(logits - m_new), axis=-1,
                                keepdims=True))
        m_ref[...] = m_new

        # Stash this tile's raw logits straight into the resident output block
        # (128-aligned dynamic lane slice -> unmasked vst).  NOTE: with a
        # sub-f32 out_dtype the logits are quantized before the final
        # subtraction (tiny, bounded error); keep an f32 scratch instead if
        # exactness matters for low-precision outputs.
        col = pl.multiple_of(j * tn_eff, 128)
        o_ref[:, pl.ds(col, tn_eff)] = logits.astype(o_ref.dtype)

        @pl.when(j == n_vt - 1)
        def _finalize():
            lse = m_ref[...] + jnp.log(l_ref[...])
            o_ref[...] = (o_ref[...].astype(jnp.float32) - lse).astype(o_ref.dtype)

    # -------------------------------------------------------------- pallas_call
    vmem_limit = min(
        max(int(1.3 * resident_bytes(tm_eff)) + (8 << 20), 32 << 20),
        vmem_cap,
    )

    cost = pl.CostEstimate(
        flops=2 * n_rows_p * d_model * vocab_p,
        transcendentals=n_rows_p * vocab_p,
        bytes_accessed=(x2d.size * x2d.dtype.itemsize
                        + n_rt * w_p.size * jnp.dtype(w_p.dtype).itemsize
                        + n_rt * b_p.size * 4
                        + n_rows_p * vocab_p * out_itemsize),
    )

    if n_vt == 1:
        kernel = kernel_single
        grid_spec = pltpu.PrefetchScalarGridSpec(
            num_scalar_prefetch=0,
            grid=(n_rt,),
            in_specs=[
                pl.BlockSpec((tm_eff, d_model), lambda i: (i, 0)),
                pl.BlockSpec((d_model, tn_eff), lambda i: (0, 0)),
                pl.BlockSpec((1, tn_eff), lambda i: (0, 0)),
            ],
            out_specs=pl.BlockSpec((tm_eff, vocab_p), lambda i: (i, 0)),
        )
        dim_sem = ("parallel",)
    else:
        kernel = kernel_tiled
        grid_spec = pltpu.PrefetchScalarGridSpec(
            num_scalar_prefetch=0,
            grid=(n_rt, n_vt),
            in_specs=[
                pl.BlockSpec((tm_eff, d_model), lambda i, j: (i, 0)),
                # TODO(synk): add pipeline_mode=pl.Buffered(3) on the weight
                # spec if profiling shows exposed weight DMA per vocab step.
                pl.BlockSpec((d_model, tn_eff), lambda i, j: (0, j)),
                pl.BlockSpec((1, tn_eff), lambda i, j: (0, j)),
            ],
            out_specs=pl.BlockSpec((tm_eff, vocab_p), lambda i, j: (i, 0)),
            scratch_shapes=[
                pltpu.VMEM((tm_eff, 1), jnp.float32),  # running max
                pltpu.VMEM((tm_eff, 1), jnp.float32),  # running sum-exp
            ],
        )
        # TODO(synk): on v7x, use CORE_PARALLEL / pl.core_map on the row axis
        # when the problem is MXU-bound to actually engage both TensorCores.
        dim_sem = ("parallel", "arbitrary")

    out2d = pl.pallas_call(
        kernel,
        out_shape=jax.ShapeDtypeStruct((n_rows_p, vocab_p), out_dtype),
        grid_spec=grid_spec,
        compiler_params=pltpu.CompilerParams(
            dimension_semantics=dim_sem,
            vmem_limit_bytes=vmem_limit,
        ),
        cost_estimate=cost,
    )(x2d, w_p, b_p)

    out2d = out2d[:n_rows, :vocab]
    return out2d.reshape(*lead, vocab)


if __name__ == "__main__":
    key = jax.random.PRNGKey(0)
    kx, kw1, kb1, kw2, kb2 = jax.random.split(key, 5)

    batch, seq, d_model = 2, 8, 32
    x = jax.random.normal(kx, (batch, seq, d_model), dtype=jnp.float32)
    x2 = x.reshape(-1, d_model)

    # ---- Case 1: small vocab (single-tile fast path), vocab=128.
    vocab1 = 128
    weight1 = jax.random.normal(kw1, (vocab1, d_model), dtype=jnp.float32) * 0.05
    bias1 = jax.random.normal(kb1, (vocab1,), dtype=jnp.float32) * 0.05
    w_t1, b1 = prepare_generator_params(weight1, bias1)
    out1 = jax.block_until_ready(generator_forward(x, w_t1, b1))

    ref1_bf16 = jax.nn.log_softmax(
        jnp.dot(x2.astype(jnp.bfloat16), w_t1.astype(jnp.bfloat16),
                preferred_element_type=jnp.float32) + b1,
        axis=-1).reshape(batch, seq, vocab1)
    ref1_f32 = jax.nn.log_softmax(
        jnp.einsum("bsd,vd->bsv", x, weight1) + bias1, axis=-1)
    assert out1.shape == (batch, seq, vocab1)
    assert out1.dtype == x.dtype
    assert jnp.allclose(out1, ref1_bf16, atol=2e-4, rtol=2e-4)
    assert jnp.allclose(out1, ref1_f32, atol=3e-2, rtol=3e-2)

    # ---- Case 2: tiled vocab axis (online-LSE path), vocab=512, tn=128.
    vocab2 = 512
    weight2 = jax.random.normal(kw2, (vocab2, d_model), dtype=jnp.float32) * 0.05
    bias2 = jax.random.normal(kb2, (vocab2,), dtype=jnp.float32) * 0.05
    w_t2, b2 = prepare_generator_params(weight2, bias2)
    out2 = jax.block_until_ready(generator_forward(x, w_t2, b2, tn=128))

    ref2_bf16 = jax.nn.log_softmax(
        jnp.dot(x2.astype(jnp.bfloat16), w_t2.astype(jnp.bfloat16),
                preferred_element_type=jnp.float32) + b2,
        axis=-1).reshape(batch, seq, vocab2)
    ref2_f32 = jax.nn.log_softmax(
        jnp.einsum("bsd,vd->bsv", x, weight2) + bias2, axis=-1)
    assert out2.shape == (batch, seq, vocab2)
    assert out2.dtype == x.dtype
    assert jnp.allclose(out2, ref2_bf16, atol=2e-4, rtol=2e-4)
    assert jnp.allclose(out2, ref2_f32, atol=3e-2, rtol=3e-2)

    print("KERNEL_OK")
</pallas_src>

<mosaic_0001>
module attributes {stable_mosaic.version = 11 : i64} {
  func.func @kernel_single(%arg0: i32, %arg1: memref<16x32xbf16, #tpu.memory_space<vmem>>, %arg2: memref<32x128xbf16, #tpu.memory_space<vmem>>, %arg3: memref<1x128xf32, #tpu.memory_space<vmem>>, %arg4: memref<16x128xf32, #tpu.memory_space<vmem>>) attributes {dimension_semantics = [#tpu.dimension_semantics<parallel>], iteration_bounds = array<i64: 1>, scalar_prefetch = 0 : i64, scratch_operands = 0 : i64, tpu.core_type = #tpu.core_type<tc>, window_params = [{transform_indices = @transform_0, window_bounds = array<i64: 16, 32>}, {pipeline_mode = #tpu.pipeline_mode<synchronous>, transform_indices = @transform_1, window_bounds = array<i64: 32, 128>}, {pipeline_mode = #tpu.pipeline_mode<synchronous>, transform_indices = @transform_2, window_bounds = array<i64: 1, 128>}, {transform_indices = @transform_3, window_bounds = array<i64: 16, 128>}]} {
    %c0 = arith.constant 0 : index
    %c0_0 = arith.constant 0 : index
    %0 = vector.load %arg1[%c0, %c0_0] : memref<16x32xbf16, #tpu.memory_space<vmem>>, vector<16x32xbf16>
    %c0_1 = arith.constant 0 : index
    %c0_2 = arith.constant 0 : index
    %1 = vector.load %arg2[%c0_1, %c0_2] : memref<32x128xbf16, #tpu.memory_space<vmem>>, vector<32x128xbf16>
    %cst = arith.constant dense<0.000000e+00> : vector<16x128xf32>
    %2 = tpu.matmul %0, %1, %cst {dimension_numbers = #tpu.dot_dimension_numbers<[1], [0], [0], [1], [0, 0, 1, 1], [], []>} : vector<16x32xbf16>, vector<32x128xbf16>, vector<16x128xf32> -> vector<16x128xf32>
    %c0_3 = arith.constant 0 : index
    %c0_4 = arith.constant 0 : index
    %3 = vector.load %arg3[%c0_3, %c0_4] : memref<1x128xf32, #tpu.memory_space<vmem>>, vector<1x128xf32>
    %4 = vector.broadcast %3 : vector<1x128xf32> to vector<16x128xf32>
    %5 = arith.addf %2, %4 : vector<16x128xf32>
    %cst_5 = arith.constant dense<0xFF800000> : vector<16xf32>
    %6 = vector.multi_reduction <maximumf>, %5, %cst_5 [1] : vector<16x128xf32> to vector<16xf32>
    %7 = vector.shape_cast %6 : vector<16xf32> to vector<16x1xf32>
    %8 = vector.broadcast %7 : vector<16x1xf32> to vector<16x128xf32>
    %9 = arith.subf %5, %8 : vector<16x128xf32>
    %10 = math.exp %9 : vector<16x128xf32>
    %cst_6 = arith.constant dense<0.000000e+00> : vector<16xf32>
    %11 = vector.multi_reduction <add>, %10, %cst_6 [1] : vector<16x128xf32> to vector<16xf32>
    %12 = vector.shape_cast %11 : vector<16xf32> to vector<16x1xf32>
    %13 = math.log %12 : vector<16x1xf32>
    %14 = arith.addf %7, %13 : vector<16x1xf32>
    %15 = vector.broadcast %14 : vector<16x1xf32> to vector<16x128xf32>
    %16 = arith.subf %5, %15 : vector<16x128xf32>
    %c0_7 = arith.constant 0 : index
    %c0_8 = arith.constant 0 : index
    %17 = vector.load %arg4[%c0_7, %c0_8] : memref<16x128xf32, #tpu.memory_space<vmem>>, vector<16x128xf32>
    tpu.vector_store %arg4[%c0_7, %c0_8], %16 {strides = array<i32>} : memref<16x128xf32, #tpu.memory_space<vmem>>, vector<16x128xf32>,
    return
  }
  func.func @transform_0(%arg0: i32) -> (i32, i32) {
    %c0_i32 = arith.constant 0 : i32
    %c0_i32_0 = arith.constant 0 : i32
    return %arg0, %c0_i32 : i32, i32
  }
  func.func @transform_1(%arg0: i32) -> (i32, i32) {
    %c0_i32 = arith.constant 0 : i32
    %c0_i32_0 = arith.constant 0 : i32
    %c0_i32_1 = arith.constant 0 : i32
    return %c0_i32, %c0_i32_0 : i32, i32
  }
  func.func @transform_2(%arg0: i32) -> (i32, i32) {
    %c0_i32 = arith.constant 0 : i32
    %c0_i32_0 = arith.constant 0 : i32
    %c0_i32_1 = arith.constant 0 : i32
    return %c0_i32, %c0_i32_0 : i32, i32
  }
  func.func @transform_3(%arg0: i32) -> (i32, i32) {
    %c0_i32 = arith.constant 0 : i32
    %c0_i32_0 = arith.constant 0 : i32
    return %arg0, %c0_i32 : i32, i32
  }
}

</mosaic_0001>

<llo_original>
// kernel: tpu_custom_call.1
$region0: #{tpu_custom_call.1}
  #allocation0 [shape = 'u32[]', space=smem, size = 0x4, offset = 0x4, fixed_abs, tag = 'smem constant byte address 0x4 - core index']
  #allocation1 [shape = 'u32[144,128]{1,0:T(1,128)}', space=vmem, size = 0x12000, scoped, tag = 'internal scratch']
  %s0 = inlined_call_operand.hbm [shape: bf16[16,32], index: 0, kind: input, shape index: {}]
  %s1 = inlined_call_operand.hbm [shape: bf16[32,128], index: 1, kind: input, shape index: {}]
  %s2 = inlined_call_operand.vmem [shape: f32[1,128], index: 2, kind: input, shape index: {}]
  %s3 = inlined_call_operand.hbm [shape: f32[16,128], index: 3, kind: output, shape index: {}]
  %s4 = sld [smem:[#allocation0]]
  $region30: #{tpu_custom_call.1} parent=0
    _
  %s6 = ssub.s32 1, %s4
  %s7 = scalar_select 0, %s6, %s4
  $region1: #{tpu_custom_call.1} parent=0
    #allocation2 [shape = 'u8[4096]{0}', space=vmem, size = 0x1000, scoped, tag = 'input window, operand 0, single buffered']
    #allocation3 [shape = 's32[1]{0}', space=sflag, size = 0x4, scoped, tag = 'scoped memory for tpu_custom_call.1']
    #allocation4 [shape = 's32[1]{0}', space=sflag, size = 0x4, scoped, tag = 'scoped memory for tpu_custom_call.1']
    #allocation5 [shape = 'u8[8192]{0}', space=vmem, size = 0x2000, scoped, tag = 'input window, operand 1, single buffered']
    #allocation6 [shape = 's32[1]{0}', space=sflag, size = 0x4, scoped, tag = 'scoped memory for tpu_custom_call.1']
    #allocation7 [shape = 'u8[8192]{0}', space=vmem, size = 0x2000, scoped, tag = 'output window, operand 0, single buffered']
    %8 = vsyncpa [#allocation3], 0
    %9 = vsyncpa [#allocation6], 0
    %10 = vsyncpa [#allocation4], 0
    // Predicated region
    $region2: #{tpu_custom_call.1} parent=1 // pred_check
      _
    $region3: #{tpu_custom_call.1} parent=1 // pred_check_branch
      %12 = sbr.rel (0) target = $region5
    $region4: #{tpu_custom_call.1} parent=1 // pred_region
      %s14 = ssub.s32 128, 128
      %15 = vsyncadd [#allocation3], %s14
      %s16 = sshll.u32 [#allocation2], 4
      %s17 = int_to_ptr.vmem [resolvable:$true] %s16
      %22 = dma.hbm_to_vmem [thread:$0]  %s0, 128, %s17, [#allocation3], 64, 64, 4
    $region5: #{tpu_custom_call.1} parent=1 // pred_fallthru
      _
    // Predicated region
    $region6: #{tpu_custom_call.1} parent=1 // pred_check
      _
    $region7: #{tpu_custom_call.1} parent=1 // pred_check_branch
      %24 = sbr.rel (0) target = $region9
    $region8: #{tpu_custom_call.1} parent=1 // pred_region
      %s26 = ssub.s32 256, 256
      %27 = vsyncadd [#allocation6], %s26
      %s28 = sshll.u32 [#allocation5], 4
      %s29 = int_to_ptr.vmem [resolvable:$true] %s28
      %34 = dma.hbm_to_vmem [thread:$0]  %s1, 256, %s29, [#allocation6], 64, 64, 4
    $region9: #{tpu_custom_call.1} parent=1 // pred_fallthru
      _
    // Predicated region
    $region10: #{tpu_custom_call.1} parent=1 // pred_check
      _
    $region11: #{tpu_custom_call.1} parent=1 // pred_check_branch
      %36 = sbr.rel (0) target = $region13
    $region12: #{tpu_custom_call.1} parent=1 // pred_region
      _
    $region13: #{tpu_custom_call.1} parent=1 // pred_fallthru
      _
    // Predicated region
    $region14: #{tpu_custom_call.1} parent=1 // pred_check
      _
    $region15: #{tpu_custom_call.1} parent=1 // pred_check_branch
      %38 = sbr.rel (0) target = $region17
    $region16: #{tpu_custom_call.1} parent=1 // pred_region
      %39 = dma.done [#allocation3], 128
    $region17: #{tpu_custom_call.1} parent=1 // pred_fallthru
      _
    // Predicated region
    $region18: #{tpu_custom_call.1} parent=1 // pred_check
      _
    $region19: #{tpu_custom_call.1} parent=1 // pred_check_branch
      %41 = sbr.rel (0) target = $region21
    $region20: #{tpu_custom_call.1} parent=1 // pred_region
      %42 = dma.done [#allocation6], 256
    $region21: #{tpu_custom_call.1} parent=1 // pred_fallthru
      _
    %v44 = vld [vmem:[#allocation2] sm:$0xf]
    %v45 = vld [vmem:[#allocation2 + $0x4] sm:$0xf]
    %v46 = vld [vmem:[#allocation5] sm:$0xf]
    %v47 = vld [vmem:[#allocation5 + $0x4] sm:$0xf]
    %v48 = vld [vmem:[#allocation5 + $0x8] sm:$0xf]
    %v49 = vld [vmem:[#allocation5 + $0xc] sm:$0xf]
    %v50 = vld [vmem:[%s2] sm:$0x1]
    %v52 = vlaneseq
    %v53 = vshrl.u32 %v52, 7
    %v54 = vsub.s32 0, %v53
    %v55 = vrot.slane %v50, %v54
    %v59 = vunpack.c.l.b16 %v44
    %v60 = vunpack.c.l.b16 %v45
    %v61 = vpack.c.b16 %v60, %v59
    %v66 = vunpack.c.l.b16 %v46
    %v67 = vunpack.c.l.b16 %v47
    %v68 = vunpack.c.l.b16 %v48
    %v69 = vunpack.c.l.b16 %v49
    %v70 = vpack.c.b16 %v67, %v66
    %v71 = vpack.c.b16 %v69, %v68
    %vm74 = vcmask 261120
    %v76 = vsel %vm74, %v61, 0
    %78 = vmatprep.subr.bf16.mxu0 0
    %79 = vmatpush1.bf16.msra.mxu0 0
    %80 = vmatprep.subr.bf16.mxu0 0
    %81 = vmatpush1.bf16.msra.mxu0 0
    %82 = vmatprep.subr.bf16.mxu0 0
    %83 = vmatpush1.bf16.msra.mxu0 0
    %84 = vmatprep.subr.bf16.mxu0 0
    %85 = vmatpush1.bf16.msra.mxu0 0
    %86 = vmatprep.subr.bf16.mxu0 0
    %87 = vmatpush1.bf16.msra.mxu0 0
    %88 = vmatprep.subr.bf16.mxu0 0
    %89 = vmatpush1.bf16.msra.mxu0 0
    %90 = vmatprep.subr.bf16.mxu0 0
    %91 = vmatpush1.bf16.msra.mxu0 %v71
    %92 = vmatprep.subr.bf16.mxu0 0
    %93 = vmatpush1.bf16.msra.mxu0 %v70
    %94 = vmatprep.subr.bf16.mxu0 0
    %95 = vmatpush2.bf16.msra.mxu0 0
    %96 = vmatprep.subr.bf16.mxu0 0
    %97 = vmatpush2.bf16.msra.mxu0 0
    %98 = vmatprep.subr.bf16.mxu0 0
    %99 = vmatpush2.bf16.msra.mxu0 0
    %100 = vmatprep.subr.bf16.mxu0 0
    %101 = vmatpush2.bf16.msra.mxu0 0
    %102 = vmatprep.subr.bf16.mxu0 0
    %103 = vmatpush2.bf16.msra.mxu0 0
    %104 = vmatprep.subr.bf16.mxu0 0
    %105 = vmatpush2.bf16.msra.mxu0 0
    %106 = vmatprep.subr.bf16.mxu0 0
    %107 = vmatpush2.bf16.msra.mxu0 0
    %108 = vmatprep.subr.bf16.mxu0 0
    %109 = vmatpush2.bf16.msra.mxu0 0
    %110 = vmatprep.mubr.bf16.mxu0 0
    %111 = vmatmul.mubr.bf16.gmra.mxu0 %v76
    %v112 = vpop.f32.mrf.mxu0
    %v113 = vadd.f32 %v55, %v112
    %v114 = vpop.f32.mrf.mxu0
    %v115 = vpop.f32.mrf.mxu0
    %v116 = vadd.f32 %v55, %v115
    %v117 = vpop.f32.mrf.mxu0
    %118 = vdwg.mxu0
    %119 = vmax.xlane.f32.xlu0 %v113
    %v120 = vpop.xlane.xlu0 %119
    %121 = vmax.xlane.f32.xlu0 %v116
    %v122 = vpop.xlane.xlu0 %121
    %v123 = vsub.f32 %v113, %v120
    %v124 = vsub.f32 %v116, %v122
    %v125 = vmul.f32 %v123, 1.442695
    %v126 = vpow.pop %v125
    %v127 = vmul.f32 %v124, 1.442695
    %v128 = vpow.pop %v127
    %129 = vadd.xlane.f32.xlu0 %v126
    %v130 = vpop.xlane.xlu0 %129
    %131 = vadd.xlane.f32.xlu0 %v128
    %v132 = vpop.xlane.xlu0 %131
    %v133 = vlog2.pop %v130
    %v134 = vmul.f32 %v133, 0.6931472
    %v135 = vlog2.pop %v132
    %v136 = vmul.f32 %v135, 0.6931472
    %v137 = vadd.f32 %v120, %v134
    %v138 = vadd.f32 %v122, %v136
    %v139 = vsub.f32 %v113, %v137
    %v140 = vsub.f32 %v116, %v138
    %141 = vst [vmem:[#allocation7] sm:$0xff] %v139
    %142 = vst [vmem:[#allocation7 + $0x8] sm:$0xff] %v140
    // Predicated region
    $region22: #{tpu_custom_call.1} parent=1 // pred_check
      _
    $region23: #{tpu_custom_call.1} parent=1 // pred_check_branch
      %144 = sbr.rel (0) target = $region25
    $region24: #{tpu_custom_call.1} parent=1 // pred_region
      %s146 = ssub.s32 256, 256
      %147 = vsyncadd [#allocation4], %s146
      %s148 = sshll.u32 [#allocation7], 4
      %s149 = int_to_ptr.vmem [resolvable:$true] %s148
      %154 = dma.vmem_to_hbm [thread:$0]  %s149, 256, %s3, [#allocation4], 128, 128, 8
    $region25: #{tpu_custom_call.1} parent=1 // pred_fallthru
      _
    // Predicated region
    $region26: #{tpu_custom_call.1} parent=1 // pred_check
      _
    $region27: #{tpu_custom_call.1} parent=1 // pred_check_branch
      %156 = sbr.rel (0) target = $region29
    $region28: #{tpu_custom_call.1} parent=1 // pred_region
      %157 = dma.done [#allocation4], 256
    $region29: #{tpu_custom_call.1} parent=1 // pred_fallthru
      _
    %158 = vsyncpa [#allocation3], 1
    %159 = vsyncpa [#allocation6], 1
    %160 = vsyncpa [#allocation4], 1

</llo_original>
